<compile_context>
chip_gen: v7x
topology: tpu7x:2x2x1
jax: 0.10.0
libtpu: 0.0.40
codegen_flags: <defaults>
</compile_context>

<pallas_src>
import jax
import jax.numpy as jnp
from jax import lax
from jax.experimental import pallas as pl
from jax.experimental.pallas import tpu as pltpu


LN_EPS = 1e-5  # torch.nn.LayerNorm default


def _round_up(x, m):
    return ((x + m - 1) // m) * m


def _mlp_kernel(x_ref, w0_ref, w1_ref, w2_ref, m_ref, b01_ref, bgb_ref, o_ref):
    """One tile of row-packed nodes through the whole MLP.

    x_ref:   (tp, P*I)  packed features (stream dtype)
    w*_ref:  block-diagonal weights; w0 in stream dtype, w1/w2/m in f32
    m_ref:   (P*O, P*O) block-diag averaging matrix for segmented LayerNorm
    b01_ref: (2, P*L) f32 = [b0_tiled; b1_tiled]
    bgb_ref: (3, P*O) f32 = [b2_tiled; gamma_tiled; beta_tiled]
    o_ref:   (tp, P*O) packed output
    """
    x = x_ref[...]
    b01 = b01_ref[...]
    bgb = bgb_ref[...]
    mavg = m_ref[...]

    # Linear 0 + ReLU (f32 accumulation on the MXU; h stays f32 afterwards).
    h = jnp.dot(x, w0_ref[...], preferred_element_type=jnp.float32)
    h = jnp.maximum(h + b01[0:1, :], 0.0)

    # Linear 1 + ReLU.
    h = jnp.dot(h, w1_ref[...], preferred_element_type=jnp.float32)
    h = jnp.maximum(h + b01[1:2, :], 0.0)

    # Linear 2 (no activation: activate_final=False).
    y = jnp.dot(h, w2_ref[...], preferred_element_type=jnp.float32) + bgb[0:1, :]

    # LayerNorm over each O-wide lane segment (one segment per packed node).
    # Segmented mean/var via the block-diagonal averaging matmul keeps the
    # computation 2-D and lane-dense (no in-kernel reshape/relayout).
    mean = jnp.dot(y, mavg, preferred_element_type=jnp.float32)
    ctr = y - mean
    var = jnp.dot(ctr * ctr, mavg, preferred_element_type=jnp.float32)
    y = ctr * lax.rsqrt(var + LN_EPS)
    y = y * bgb[1:2, :] + bgb[2:3, :]

    o_ref[...] = y.astype(o_ref.dtype)


def mlp_pallas(features, params, *, tile_n=4096, stream_dtype=None):
    """features: (N, in_dim). params: dict (see init_params).

    tile_n:       target node-row tile (4096 default; 8192 is a good choice on
                  v7x).  Per-step HBM traffic must dominate the ~0.35us grid
                  step overhead.
    stream_dtype: e.g. jnp.bfloat16 to halve the bytes streamed for features /
                  W0 / output.  Matmul accumulation and LayerNorm stay f32.
    """
    n, in_dim = features.shape
    w0, w1, w2 = params["w0"], params["w1"], params["w2"]
    latent, out_dim = w0.shape[1], w2.shape[1]

    cdtype = jnp.dtype(stream_dtype) if stream_dtype is not None else jnp.dtype(
        features.dtype)
    features = features.astype(cdtype)

    # ---- row-pack factor: make the streamed slabs lane-dense (>=128 lanes)
    # while keeping the block-diagonal weights small. -------------------------
    pack = max(1, -(-128 // min(in_dim, out_dim)))      # ceil(128 / min dim)
    while pack > 1 and pack * max(in_dim, latent, out_dim) > 512:
        pack -= 1
    P = pack

    # ---- block-diagonal weights / tiled vectors (built once; tiny). ---------
    eyeP = jnp.eye(P, dtype=jnp.float32)
    w0b = jnp.kron(eyeP, w0.astype(jnp.float32)).astype(cdtype)   # (P*I, P*L)
    w1b = jnp.kron(eyeP, w1.astype(jnp.float32))                  # (P*L, P*L) f32
    w2b = jnp.kron(eyeP, w2.astype(jnp.float32))                  # (P*L, P*O) f32
    mavg = jnp.kron(eyeP, jnp.full((out_dim, out_dim), 1.0 / out_dim,
                                   jnp.float32))                  # (P*O, P*O) f32
    b01 = jnp.concatenate(
        [jnp.tile(params["b0"].astype(jnp.float32), (1, P)),
         jnp.tile(params["b1"].astype(jnp.float32), (1, P))], axis=0)  # (2, P*L)
    bgb = jnp.concatenate(
        [jnp.tile(params["b2"].astype(jnp.float32), (1, P)),
         jnp.tile(params["gamma"].astype(jnp.float32), (1, P)),
         jnp.tile(params["beta"].astype(jnp.float32), (1, P))], axis=0)  # (3, P*O)

    # ---- tiling over packed rows (dtype-aware sublane quantum). --------------
    sub = 8 if jnp.dtype(cdtype).itemsize >= 4 else 16
    np_rows = _round_up(-(-n // P), sub)                 # packed rows (aligned)
    tp = min(np_rows, max(sub, (max(1, tile_n // P) // sub) * sub))
    if tp >= np_rows and np_rows > sub:
        # Guarantee >=2 grid steps so both v7x TensorCores get work.
        tp = max(sub, ((np_rows // 2) // sub) * sub)
    np_pad = _round_up(np_rows, tp)
    grid = (np_pad // tp,)
    n_pad = np_pad * P

    # Zero-pad ragged N and present the input as a lane-dense (.., P*I) slab
    # (pure row-major re-view: row r = nodes r*P .. r*P+P-1 concatenated).
    if n_pad != n:
        features = jnp.pad(features, ((0, n_pad - n), (0, 0)))
    xp = features.reshape(np_pad, P * in_dim)

    def const2(shape):
        # Parameter block with a constant index_map: resident in VMEM.
        return pl.BlockSpec(shape, lambda i: (0, 0))

    def build_call(x_spec):
        return pl.pallas_call(
            _mlp_kernel,
            out_shape=jax.ShapeDtypeStruct((np_pad, P * out_dim), cdtype),
            grid_spec=pltpu.PrefetchScalarGridSpec(
                num_scalar_prefetch=0,
                grid=grid,
                in_specs=[
                    x_spec,                                   # packed features
                    const2((P * in_dim, P * latent)),         # W0 (block diag)
                    const2((P * latent, P * latent)),         # W1 (block diag)
                    const2((P * latent, P * out_dim)),        # W2 (block diag)
                    const2((P * out_dim, P * out_dim)),       # LN averaging mat
                    const2((2, P * latent)),                  # [b0; b1]
                    const2((3, P * out_dim)),                 # [b2; gamma; beta]
                ],
                out_specs=pl.BlockSpec((tp, P * out_dim), lambda i: (i, 0)),
            ),
            compiler_params=pltpu.CompilerParams(
                dimension_semantics=("parallel",)),
        )

    operands = (xp, w0b, w1b, w2b, mavg, b01, bgb)
    try:
        # Triple-buffer the streamed activations (hides small-DMA latency,
        # mainly a v7x win); weights are constant-index and stay resident.
        x_spec = pl.BlockSpec((tp, P * in_dim), lambda i: (i, 0),
                              pipeline_mode=pl.Buffered(3))
        out_packed = build_call(x_spec)(*operands)
    except Exception:
        # pipeline_mode / Buffered not supported on this jax: default 2-deep.
        x_spec = pl.BlockSpec((tp, P * in_dim), lambda i: (i, 0))
        out_packed = build_call(x_spec)(*operands)

    out = out_packed.reshape(n_pad, out_dim)
    return out[:n] if n_pad != n else out


def init_params(key, in_dim, latent, out_dim):
    """Deterministic synthetic init (shapes match MLP(in, latent, 2, out))."""
    ks = jax.random.split(key, 8)
    scale = 0.1
    return {
        "w0": scale * jax.random.normal(ks[0], (in_dim, latent), jnp.float32),
        "b0": scale * jax.random.normal(ks[1], (1, latent), jnp.float32),
        "w1": scale * jax.random.normal(ks[2], (latent, latent), jnp.float32),
        "b1": scale * jax.random.normal(ks[3], (1, latent), jnp.float32),
        "w2": scale * jax.random.normal(ks[4], (latent, out_dim), jnp.float32),
        "b2": scale * jax.random.normal(ks[5], (1, out_dim), jnp.float32),
        "gamma": 1.0 + scale * jax.random.normal(ks[6], (1, out_dim), jnp.float32),
        "beta": scale * jax.random.normal(ks[7], (1, out_dim), jnp.float32),
    }


def mlp_reference(features, p):
    """Pure-JAX reference mirroring the torch nn.Sequential semantics."""
    h = jnp.maximum(features @ p["w0"] + p["b0"], 0.0)
    h = jnp.maximum(h @ p["w1"] + p["b1"], 0.0)
    y = h @ p["w2"] + p["b2"]
    mean = jnp.mean(y, axis=-1, keepdims=True)
    var = jnp.mean((y - mean) ** 2, axis=-1, keepdims=True)
    return (y - mean) / jnp.sqrt(var + LN_EPS) * p["gamma"] + p["beta"]


if __name__ == "__main__":
    # MLP(input_size=16, latent_size=32, num_layers=2, output_size=32,
    #     layer_norm=True, activate_final=False) applied to 256 "nodes".
    N, IN_DIM, LATENT, OUT_DIM = 256, 16, 32, 32

    key = jax.random.PRNGKey(0)
    k_x, k_p = jax.random.split(key)
    features = jax.random.normal(k_x, (N, IN_DIM), jnp.float32)
    params = init_params(k_p, IN_DIM, LATENT, OUT_DIM)

    ref = mlp_reference(features, params)

    # Default f32 path (packed lane-dense input/output, >=2 grid steps).
    out = jax.block_until_ready(mlp_pallas(features, params))
    assert out.shape == (N, OUT_DIM)
    assert jnp.allclose(out, ref, atol=1e-4, rtol=1e-4), "f32 default mismatch"

    # Ragged N (exercises the zero-padding path) with a small explicit tile.
    out_r = jax.block_until_ready(mlp_pallas(features[:201], params, tile_n=128))
    assert out_r.shape == (201, OUT_DIM)
    assert jnp.allclose(out_r, ref[:201], atol=1e-4, rtol=1e-4), \
        "f32 ragged/padded mismatch"

    # bf16 streaming path (features / W0 / output bf16; f32 accumulation & LN).
    out_bf = jax.block_until_ready(
        mlp_pallas(features, params, stream_dtype=jnp.bfloat16))
    assert out_bf.dtype == jnp.bfloat16
    assert jnp.allclose(out_bf.astype(jnp.float32), ref, atol=5e-2, rtol=5e-2), \
        "bf16 streaming mismatch"

    print("KERNEL_OK")
</pallas_src>

<mosaic_0001>
module attributes {stable_mosaic.version = 11 : i64} {
  func.func @_mlp_kernel(%arg0: i32, %arg1: memref<16x128xf32, #tpu.memory_space<vmem>>, %arg2: memref<128x256xf32, #tpu.memory_space<vmem>>, %arg3: memref<256x256xf32, #tpu.memory_space<vmem>>, %arg4: memref<256x256xf32, #tpu.memory_space<vmem>>, %arg5: memref<256x256xf32, #tpu.memory_space<vmem>>, %arg6: memref<2x256xf32, #tpu.memory_space<vmem>>, %arg7: memref<3x256xf32, #tpu.memory_space<vmem>>, %arg8: memref<16x256xf32, #tpu.memory_space<vmem>>) attributes {dimension_semantics = [#tpu.dimension_semantics<parallel>], iteration_bounds = array<i64: 2>, scalar_prefetch = 0 : i64, scratch_operands = 0 : i64, tpu.core_type = #tpu.core_type<tc>, window_params = [{transform_indices = @transform_0, window_bounds = array<i64: 16, 128>}, {pipeline_mode = #tpu.pipeline_mode<synchronous>, transform_indices = @transform_1, window_bounds = array<i64: 128, 256>}, {pipeline_mode = #tpu.pipeline_mode<synchronous>, transform_indices = @transform_2, window_bounds = array<i64: 256, 256>}, {pipeline_mode = #tpu.pipeline_mode<synchronous>, transform_indices = @transform_3, window_bounds = array<i64: 256, 256>}, {pipeline_mode = #tpu.pipeline_mode<synchronous>, transform_indices = @transform_4, window_bounds = array<i64: 256, 256>}, {pipeline_mode = #tpu.pipeline_mode<synchronous>, transform_indices = @transform_5, window_bounds = array<i64: 2, 256>}, {pipeline_mode = #tpu.pipeline_mode<synchronous>, transform_indices = @transform_6, window_bounds = array<i64: 3, 256>}, {transform_indices = @transform_7, window_bounds = array<i64: 16, 256>}]} {
    %c0 = arith.constant 0 : index
    %c0_0 = arith.constant 0 : index
    %0 = vector.load %arg1[%c0, %c0_0] : memref<16x128xf32, #tpu.memory_space<vmem>>, vector<16x128xf32>
    %c0_1 = arith.constant 0 : index
    %c0_2 = arith.constant 0 : index
    %1 = vector.load %arg6[%c0_1, %c0_2] : memref<2x256xf32, #tpu.memory_space<vmem>>, vector<2x256xf32>
    %c0_3 = arith.constant 0 : index
    %c0_4 = arith.constant 0 : index
    %2 = vector.load %arg7[%c0_3, %c0_4] : memref<3x256xf32, #tpu.memory_space<vmem>>, vector<3x256xf32>
    %c0_5 = arith.constant 0 : index
    %c0_6 = arith.constant 0 : index
    %3 = vector.load %arg5[%c0_5, %c0_6] : memref<256x256xf32, #tpu.memory_space<vmem>>, vector<256x256xf32>
    %c0_7 = arith.constant 0 : index
    %c0_8 = arith.constant 0 : index
    %4 = vector.load %arg2[%c0_7, %c0_8] : memref<128x256xf32, #tpu.memory_space<vmem>>, vector<128x256xf32>
    %cst = arith.constant dense<0.000000e+00> : vector<16x256xf32>
    %5 = tpu.matmul %0, %4, %cst {dimension_numbers = #tpu.dot_dimension_numbers<[1], [0], [0], [1], [0, 0, 1, 1], [], []>} : vector<16x128xf32>, vector<128x256xf32>, vector<16x256xf32> -> vector<16x256xf32>
    %6 = vector.extract_strided_slice %1 {offsets = [0, 0], sizes = [1, 256], strides = [1, 1]} : vector<2x256xf32> to vector<1x256xf32>
    %7 = vector.broadcast %6 : vector<1x256xf32> to vector<16x256xf32>
    %8 = arith.addf %5, %7 : vector<16x256xf32>
    %cst_9 = arith.constant 0.000000e+00 : f32
    %9 = vector.broadcast %cst_9 : f32 to vector<16x256xf32>
    %10 = arith.maximumf %8, %9 : vector<16x256xf32>
    %c0_10 = arith.constant 0 : index
    %c0_11 = arith.constant 0 : index
    %11 = vector.load %arg3[%c0_10, %c0_11] : memref<256x256xf32, #tpu.memory_space<vmem>>, vector<256x256xf32>
    %cst_12 = arith.constant dense<0.000000e+00> : vector<16x256xf32>
    %12 = tpu.matmul %10, %11, %cst_12 {dimension_numbers = #tpu.dot_dimension_numbers<[1], [0], [0], [1], [0, 0, 1, 1], [], []>} : vector<16x256xf32>, vector<256x256xf32>, vector<16x256xf32> -> vector<16x256xf32>
    %13 = vector.extract_strided_slice %1 {offsets = [1, 0], sizes = [1, 256], strides = [1, 1]} : vector<2x256xf32> to vector<1x256xf32>
    %14 = vector.broadcast %13 : vector<1x256xf32> to vector<16x256xf32>
    %15 = arith.addf %12, %14 : vector<16x256xf32>
    %cst_13 = arith.constant 0.000000e+00 : f32
    %16 = vector.broadcast %cst_13 : f32 to vector<16x256xf32>
    %17 = arith.maximumf %15, %16 : vector<16x256xf32>
    %c0_14 = arith.constant 0 : index
    %c0_15 = arith.constant 0 : index
    %18 = vector.load %arg4[%c0_14, %c0_15] : memref<256x256xf32, #tpu.memory_space<vmem>>, vector<256x256xf32>
    %cst_16 = arith.constant dense<0.000000e+00> : vector<16x256xf32>
    %19 = tpu.matmul %17, %18, %cst_16 {dimension_numbers = #tpu.dot_dimension_numbers<[1], [0], [0], [1], [0, 0, 1, 1], [], []>} : vector<16x256xf32>, vector<256x256xf32>, vector<16x256xf32> -> vector<16x256xf32>
    %20 = vector.extract_strided_slice %2 {offsets = [0, 0], sizes = [1, 256], strides = [1, 1]} : vector<3x256xf32> to vector<1x256xf32>
    %21 = vector.broadcast %20 : vector<1x256xf32> to vector<16x256xf32>
    %22 = arith.addf %19, %21 : vector<16x256xf32>
    %cst_17 = arith.constant dense<0.000000e+00> : vector<16x256xf32>
    %23 = tpu.matmul %22, %3, %cst_17 {dimension_numbers = #tpu.dot_dimension_numbers<[1], [0], [0], [1], [0, 0, 1, 1], [], []>} : vector<16x256xf32>, vector<256x256xf32>, vector<16x256xf32> -> vector<16x256xf32>
    %24 = arith.subf %22, %23 : vector<16x256xf32>
    %25 = arith.mulf %24, %24 : vector<16x256xf32>
    %cst_18 = arith.constant dense<0.000000e+00> : vector<16x256xf32>
    %26 = tpu.matmul %25, %3, %cst_18 {dimension_numbers = #tpu.dot_dimension_numbers<[1], [0], [0], [1], [0, 0, 1, 1], [], []>} : vector<16x256xf32>, vector<256x256xf32>, vector<16x256xf32> -> vector<16x256xf32>
    %cst_19 = arith.constant 9.99999974E-6 : f32
    %27 = vector.broadcast %cst_19 : f32 to vector<16x256xf32>
    %28 = arith.addf %26, %27 : vector<16x256xf32>
    %29 = math.rsqrt %28 : vector<16x256xf32>
    %30 = arith.mulf %24, %29 : vector<16x256xf32>
    %31 = vector.extract_strided_slice %2 {offsets = [1, 0], sizes = [1, 256], strides = [1, 1]} : vector<3x256xf32> to vector<1x256xf32>
    %32 = vector.broadcast %31 : vector<1x256xf32> to vector<16x256xf32>
    %33 = arith.mulf %30, %32 : vector<16x256xf32>
    %34 = vector.extract_strided_slice %2 {offsets = [2, 0], sizes = [1, 256], strides = [1, 1]} : vector<3x256xf32> to vector<1x256xf32>
    %35 = vector.broadcast %34 : vector<1x256xf32> to vector<16x256xf32>
    %36 = arith.addf %33, %35 : vector<16x256xf32>
    %c0_20 = arith.constant 0 : index
    %c0_21 = arith.constant 0 : index
    %37 = vector.load %arg8[%c0_20, %c0_21] : memref<16x256xf32, #tpu.memory_space<vmem>>, vector<16x256xf32>
    tpu.vector_store %arg8[%c0_20, %c0_21], %36 {strides = array<i32>} : memref<16x256xf32, #tpu.memory_space<vmem>>, vector<16x256xf32>,
    return
  }
  func.func @transform_0(%arg0: i32) -> (i32, i32) {
    %c0_i32 = arith.constant 0 : i32
    %c0_i32_0 = arith.constant 0 : i32
    return %arg0, %c0_i32 : i32, i32
  }
  func.func @transform_1(%arg0: i32) -> (i32, i32) {
    %c0_i32 = arith.constant 0 : i32
    %c0_i32_0 = arith.constant 0 : i32
    %c0_i32_1 = arith.constant 0 : i32
    return %c0_i32, %c0_i32_0 : i32, i32
  }
  func.func @transform_2(%arg0: i32) -> (i32, i32) {
    %c0_i32 = arith.constant 0 : i32
    %c0_i32_0 = arith.constant 0 : i32
    %c0_i32_1 = arith.constant 0 : i32
    return %c0_i32, %c0_i32_0 : i32, i32
  }
  func.func @transform_3(%arg0: i32) -> (i32, i32) {
    %c0_i32 = arith.constant 0 : i32
    %c0_i32_0 = arith.constant 0 : i32
    %c0_i32_1 = arith.constant 0 : i32
    return %c0_i32, %c0_i32_0 : i32, i32
  }
  func.func @transform_4(%arg0: i32) -> (i32, i32) {
    %c0_i32 = arith.constant 0 : i32
    %c0_i32_0 = arith.constant 0 : i32
    %c0_i32_1 = arith.constant 0 : i32
    return %c0_i32, %c0_i32_0 : i32, i32
  }
  func.func @transform_5(%arg0: i32) -> (i32, i32) {
    %c0_i32 = arith.constant 0 : i32
    %c0_i32_0 = arith.constant 0 : i32
    %c0_i32_1 = arith.constant 0 : i32
    return %c0_i32, %c0_i32_0 : i32, i32
  }
  func.func @transform_6(%arg0: i32) -> (i32, i32) {
    %c0_i32 = arith.constant 0 : i32
    %c0_i32_0 = arith.constant 0 : i32
    %c0_i32_1 = arith.constant 0 : i32
    return %c0_i32, %c0_i32_0 : i32, i32
  }
  func.func @transform_7(%arg0: i32) -> (i32, i32) {
    %c0_i32 = arith.constant 0 : i32
    %c0_i32_0 = arith.constant 0 : i32
    return %arg0, %c0_i32 : i32, i32
  }
}

</mosaic_0001>

<llo_original>
// kernel: tpu_custom_call.1
$region0: #{tpu_custom_call.1}
  #allocation0 [shape = 'u32[]', space=smem, size = 0x4, offset = 0x4, fixed_abs, tag = 'smem constant byte address 0x4 - core index']
  #allocation1 [shape = 'u32[144,128]{1,0:T(1,128)}', space=vmem, size = 0x12000, scoped, tag = 'internal scratch']
  %s0 = inlined_call_operand.hbm [shape: f32[32,128], index: 0, kind: input, shape index: {}]
  %s1 = inlined_call_operand.hbm [shape: f32[128,256], index: 1, kind: input, shape index: {}]
  %s2 = inlined_call_operand.hbm [shape: f32[256,256], index: 2, kind: input, shape index: {}]
  %s3 = inlined_call_operand.hbm [shape: f32[256,256], index: 3, kind: input, shape index: {}]
  %s4 = inlined_call_operand.hbm [shape: f32[256,256], index: 4, kind: input, shape index: {}]
  %s5 = inlined_call_operand.vmem [shape: f32[2,256], index: 5, kind: input, shape index: {}]
  %s6 = inlined_call_operand.vmem [shape: f32[3,256], index: 6, kind: input, shape index: {}]
  %s7 = inlined_call_operand.hbm [shape: f32[32,256], index: 7, kind: output, shape index: {}]
  %s8 = sld [smem:[#allocation0]]
  $region81: #{tpu_custom_call.1} parent=0
    _
  %s10 = ssub.s32 1, %s8
  %s11 = scalar_select 0, %s10, %s8
  $region1: #{tpu_custom_call.1} parent=0
    #allocation2 [shape = 'u8[16384]{0}', space=vmem, size = 0x4000, scoped, tag = 'input window, operand 0']
    #allocation3 [shape = 's32[2]{0}', space=sflag, size = 0x8, scoped, tag = 'scoped memory for tpu_custom_call.1']
    #allocation4 [shape = 's32[2]{0}', space=sflag, size = 0x8, scoped, tag = 'scoped memory for tpu_custom_call.1']
    #allocation5 [shape = 'u8[131072]{0}', space=vmem, size = 0x20000, scoped, tag = 'input window, operand 1, single buffered']
    #allocation6 [shape = 's32[1]{0}', space=sflag, size = 0x4, scoped, tag = 'scoped memory for tpu_custom_call.1']
    #allocation7 [shape = 'u8[262144]{0}', space=vmem, size = 0x40000, scoped, tag = 'input window, operand 2, single buffered']
    #allocation8 [shape = 'u8[262144]{0}', space=vmem, size = 0x40000, scoped, tag = 'input window, operand 3, single buffered']
    #allocation9 [shape = 's32[1]{0}', space=sflag, size = 0x4, scoped, tag = 'scoped memory for tpu_custom_call.1']
    #allocation10 [shape = 'u8[262144]{0}', space=vmem, size = 0x40000, scoped, tag = 'input window, operand 4, single buffered']
    #allocation11 [shape = 'u8[32768]{0}', space=vmem, size = 0x8000, scoped, tag = 'output window, operand 0']
    %12 = vsyncpa [#allocation3], 0
    %s13 = scalar_lea.sflag [#allocation3], 1
    %14 = vsyncpa %s13, 0
    %15 = vsyncpa [#allocation6], 0
    %16 = vsyncpa [#allocation9], 0
    %17 = vsyncpa [#allocation4], 0
    %s18 = scalar_lea.sflag [#allocation4], 1
    %19 = vsyncpa %s18, 0
    loop: start=0, step=1, limit=4
    $region2: #{tpu_custom_call.1} parent=1 // loop_pre_header
      _
    $region3: #{tpu_custom_call.1} parent=1 // loop_header
      %s21 = sphi 0, %s25
      %p22 = scmp.ge.s32.totalorder %s21, 4
      %s31 = sphi 0, %s33
      %s34 = sphi 0, %s31
      %s35 = sphi 0, %s34
      %s51 = sphi 0, %s35
      %s55 = sphi 0, %s55
      %s57 = sphi 0, %s55
      %s58 = sphi 0, %s57
      %s72 = sphi 0, %s58
      %s76 = sphi 0, %s76
      %s78 = sphi 0, %s76
      %s79 = sphi 0, %s78
      %s93 = sphi 0, %s79
      %s97 = sphi 0, %s97
      %s99 = sphi 0, %s97
      %s100 = sphi 0, %s99
      %s114 = sphi 0, %s100
      %s118 = sphi 0, %s118
      %s120 = sphi 0, %s118
      %s121 = sphi 0, %s120
      %s135 = sphi 0, %s121
      %s139 = sphi 0, %s139
      %s141 = sphi 0, %s139
      %s142 = sphi 0, %s141
      %s156 = sphi 0, %s142
      %s160 = sphi 0, %s160
      %s162 = sphi 0, %s160
      %s163 = sphi 0, %s162
      %s177 = sphi 0, %s163
      %s183 = sphi 0, %s185
      %s186 = sphi 0, %s183
      %s187 = sphi 0, %s186
      %s203 = sphi 0, %s187
    $region4: #{tpu_custom_call.1} parent=1 // loop_header_branch
      %24 = sbr.rel (%p22) target = $region8
    $region5: #{tpu_custom_call.1} parent=1 // loop_body
      %s26 = ssub.s32 %s21, 1
      %s27 = ssub.s32 %s21, 2
      %s28 = sadd.s32 %s21, 1
      %s29 = ssub.s32 %s21, %s28
      %p30 = scmp.eq.s32.totalorder %s29, 0
      %s32 = sadd.s32 %s31, 1
      %s33 = scalar_select %p30, %s31, %s32
      %p36 = pneg %p30
      %p37 = scmp.eq.s32.totalorder %s21, 1
      %p38 = por %p36, %p37
      %p39 = scmp.ne.s32.totalorder %s31, %s34
      %p40 = scmp.eq.s32.totalorder %s21, 0
      %p41 = por %p39, %p40
      %p42 = scmp.ne.s32.totalorder %s31, %s34
      %p43 = scmp.eq.s32.totalorder %s26, 1
      %p44 = por %p42, %p43
      %p45 = scmp.ne.s32.totalorder %s34, %s35
      %p46 = scmp.eq.s32.totalorder %s26, 0
      %p47 = por %p45, %p46
      %p48 = scmp.ne.s32.totalorder %s34, %s35
      %p49 = scmp.eq.s32.totalorder %s27, 1
      %p50 = por %p48, %p49
      %p52 = scmp.ne.s32.totalorder %s35, %s51
      %p53 = scmp.eq.s32.totalorder %s27, 0
      %p54 = por %p52, %p53
      %s56 = sadd.s32 %s55, 1
      %p59 = scmp.eq.s32.totalorder %s21, 1
      %p60 = scmp.ne.s32.totalorder %s55, %s57
      %p61 = scmp.eq.s32.totalorder %s21, 0
      %p62 = por %p60, %p61
      %p63 = scmp.ne.s32.totalorder %s55, %s57
      %p64 = scmp.eq.s32.totalorder %s26, 1
      %p65 = por %p63, %p64
      %p66 = scmp.ne.s32.totalorder %s57, %s58
      %p67 = scmp.eq.s32.totalorder %s26, 0
      %p68 = por %p66, %p67
      %p69 = scmp.ne.s32.totalorder %s57, %s58
      %p70 = scmp.eq.s32.totalorder %s27, 1
      %p71 = por %p69, %p70
      %p73 = scmp.ne.s32.totalorder %s58, %s72
      %p74 = scmp.eq.s32.totalorder %s27, 0
      %p75 = por %p73, %p74
      %s77 = sadd.s32 %s76, 1
      %p80 = scmp.eq.s32.totalorder %s21, 1
      %p81 = scmp.ne.s32.totalorder %s76, %s78
      %p82 = scmp.eq.s32.totalorder %s21, 0
      %p83 = por %p81, %p82
      %p84 = scmp.ne.s32.totalorder %s76, %s78
      %p85 = scmp.eq.s32.totalorder %s26, 1
      %p86 = por %p84, %p85
      %p87 = scmp.ne.s32.totalorder %s78, %s79
      %p88 = scmp.eq.s32.totalorder %s26, 0
      %p89 = por %p87, %p88
      %p90 = scmp.ne.s32.totalorder %s78, %s79
      %p91 = scmp.eq.s32.totalorder %s27, 1
      %p92 = por %p90, %p91
      %p94 = scmp.ne.s32.totalorder %s79, %s93
      %p95 = scmp.eq.s32.totalorder %s27, 0
      %p96 = por %p94, %p95
      %s98 = sadd.s32 %s97, 1
      %p101 = scmp.eq.s32.totalorder %s21, 1
      %p102 = scmp.ne.s32.totalorder %s97, %s99
      %p103 = scmp.eq.s32.totalorder %s21, 0
      %p104 = por %p102, %p103
      %p105 = scmp.ne.s32.totalorder %s97, %s99
      %p106 = scmp.eq.s32.totalorder %s26, 1
      %p107 = por %p105, %p106
      %p108 = scmp.ne.s32.totalorder %s99, %s100
      %p109 = scmp.eq.s32.totalorder %s26, 0
      %p110 = por %p108, %p109
      %p111 = scmp.ne.s32.totalorder %s99, %s100
      %p112 = scmp.eq.s32.totalorder %s27, 1
      %p113 = por %p111, %p112
      %p115 = scmp.ne.s32.totalorder %s100, %s114
      %p116 = scmp.eq.s32.totalorder %s27, 0
      %p117 = por %p115, %p116
      %s119 = sadd.s32 %s118, 1
      %p122 = scmp.eq.s32.totalorder %s21, 1
      %p123 = scmp.ne.s32.totalorder %s118, %s120
      %p124 = scmp.eq.s32.totalorder %s21, 0
      %p125 = por %p123, %p124
      %p126 = scmp.ne.s32.totalorder %s118, %s120
      %p127 = scmp.eq.s32.totalorder %s26, 1
      %p128 = por %p126, %p127
      %p129 = scmp.ne.s32.totalorder %s120, %s121
      %p130 = scmp.eq.s32.totalorder %s26, 0
      %p131 = por %p129, %p130
      %p132 = scmp.ne.s32.totalorder %s120, %s121
      %p133 = scmp.eq.s32.totalorder %s27, 1
      %p134 = por %p132, %p133
      %p136 = scmp.ne.s32.totalorder %s121, %s135
      %p137 = scmp.eq.s32.totalorder %s27, 0
      %p138 = por %p136, %p137
      %s140 = sadd.s32 %s139, 1
      %p143 = scmp.eq.s32.totalorder %s21, 1
      %p144 = scmp.ne.s32.totalorder %s139, %s141
      %p145 = scmp.eq.s32.totalorder %s21, 0
      %p146 = por %p144, %p145
      %p147 = scmp.ne.s32.totalorder %s139, %s141
      %p148 = scmp.eq.s32.totalorder %s26, 1
      %p149 = por %p147, %p148
      %p150 = scmp.ne.s32.totalorder %s141, %s142
      %p151 = scmp.eq.s32.totalorder %s26, 0
      %p152 = por %p150, %p151
      %p153 = scmp.ne.s32.totalorder %s141, %s142
      %p154 = scmp.eq.s32.totalorder %s27, 1
      %p155 = por %p153, %p154
      %p157 = scmp.ne.s32.totalorder %s142, %s156
      %p158 = scmp.eq.s32.totalorder %s27, 0
      %p159 = por %p157, %p158
      %s161 = sadd.s32 %s160, 1
      %p164 = scmp.eq.s32.totalorder %s21, 1
      %p165 = scmp.ne.s32.totalorder %s160, %s162
      %p166 = scmp.eq.s32.totalorder %s21, 0
      %p167 = por %p165, %p166
      %p168 = scmp.ne.s32.totalorder %s160, %s162
      %p169 = scmp.eq.s32.totalorder %s26, 1
      %p170 = por %p168, %p169
      %p171 = scmp.ne.s32.totalorder %s162, %s163
      %p172 = scmp.eq.s32.totalorder %s26, 0
      %p173 = por %p171, %p172
      %p174 = scmp.ne.s32.totalorder %s162, %s163
      %p175 = scmp.eq.s32.totalorder %s27, 1
      %p176 = por %p174, %p175
      %p178 = scmp.ne.s32.totalorder %s163, %s177
      %p179 = scmp.eq.s32.totalorder %s27, 0
      %p180 = por %p178, %p179
      %s181 = ssub.s32 %s21, %s28
      %p182 = scmp.eq.s32.totalorder %s181, 0
      %s184 = sadd.s32 %s183, 1
      %s185 = scalar_select %p182, %s183, %s184
      %p188 = pneg %p182
      %p189 = scmp.eq.s32.totalorder %s21, 1
      %p190 = por %p188, %p189
      %p191 = scmp.ne.s32.totalorder %s183, %s186
      %p192 = scmp.eq.s32.totalorder %s21, 0
      %p193 = por %p191, %p192
      %p194 = scmp.ne.s32.totalorder %s183, %s186
      %p195 = scmp.eq.s32.totalorder %s26, 1
      %p196 = por %p194, %p195
      %p197 = scmp.ne.s32.totalorder %s186, %s187
      %p198 = scmp.eq.s32.totalorder %s26, 0
      %p199 = por %p197, %p198
      %p200 = scmp.ne.s32.totalorder %s186, %s187
      %p201 = scmp.eq.s32.totalorder %s27, 1
      %p202 = por %p200, %p201
      %p204 = scmp.ne.s32.totalorder %s187, %s203
      %p205 = scmp.eq.s32.totalorder %s27, 0
      %p206 = por %p204, %p205
      %p207 = scmp.le.s32.totalorder 1, %s21
      %p208 = scmp.lt.s32.totalorder %s21, 3
      %p209 = pnand %p207, %p208
      %p210 = pneg %p209
      // Predicated region
      $region9: #{tpu_custom_call.1} parent=5 // pred_check
        _
      $region10: #{tpu_custom_call.1} parent=5 // pred_check_branch
        %212 = sbr.rel (%p209) target = $region12
      $region11: #{tpu_custom_call.1} parent=5 // pred_region
        %s213 = ssub.s32 %s21, 1
        // Predicated region
        $region13: #{tpu_custom_call.1} parent=11 // pred_check
          %p214 = pneg %p68
        $region14: #{tpu_custom_call.1} parent=11 // pred_check_branch
          %216 = sbr.rel (%p214) target = $region16
        $region15: #{tpu_custom_call.1} parent=11 // pred_region
          %s218 = ssub.s32 4096, 4096
          %219 = vsyncadd [#allocation6], %s218
          %s220 = sshll.u32 [#allocation5], 4
          %s221 = int_to_ptr.vmem [resolvable:$true] %s220
          %226 = dma.hbm_to_vmem [thread:$0]  %s1, 4096, %s221, [#allocation6], 256, 256, 16
        $region16: #{tpu_custom_call.1} parent=11 // pred_fallthru
          _
        // Predicated region
        $region17: #{tpu_custom_call.1} parent=11 // pred_check
          %p227 = pneg %p89
        $region18: #{tpu_custom_call.1} parent=11 // pred_check_branch
          %229 = sbr.rel (%p227) target = $region20
        $region19: #{tpu_custom_call.1} parent=11 // pred_region
          %s231 = ssub.s32 8192, 8192
          %232 = vsyncadd [#allocation6], %s231
          %s233 = sshll.u32 [#allocation7], 4
          %s234 = int_to_ptr.vmem [resolvable:$true] %s233
          %239 = dma.hbm_to_vmem [thread:$0]  %s2, 8192, %s234, [#allocation6], 256, 256, 16
        $region20: #{tpu_custom_call.1} parent=11 // pred_fallthru
          _
        // Predicated region
        $region21: #{tpu_custom_call.1} parent=11 // pred_check
          %p240 = pneg %p110
        $region22: #{tpu_custom_call.1} parent=11 // pred_check_branch
          %242 = sbr.rel (%p240) target = $region24
        $region23: #{tpu_custom_call.1} parent=11 // pred_region
          %s244 = ssub.s32 8192, 8192
          %245 = vsyncadd [#allocation9], %s244
          %s246 = sshll.u32 [#allocation8], 4
          %s247 = int_to_ptr.vmem [resolvable:$true] %s246
          %252 = dma.hbm_to_vmem [thread:$0]  %s3, 8192, %s247, [#allocation9], 256, 256, 16
        $region24: #{tpu_custom_call.1} parent=11 // pred_fallthru
          _
        // Predicated region
        $region25: #{tpu_custom_call.1} parent=11 // pred_check
          %p253 = pneg %p131
        $region26: #{tpu_custom_call.1} parent=11 // pred_check_branch
          %255 = sbr.rel (%p253) target = $region28
        $region27: #{tpu_custom_call.1} parent=11 // pred_region
          %s257 = ssub.s32 8192, 8192
          %258 = vsyncadd [#allocation9], %s257
          %s259 = sshll.u32 [#allocation10], 4
          %s260 = int_to_ptr.vmem [resolvable:$true] %s259
          %265 = dma.hbm_to_vmem [thread:$0]  %s4, 8192, %s260, [#allocation9], 256, 256, 16
        $region28: #{tpu_custom_call.1} parent=11 // pred_fallthru
          _
        // Predicated region
        $region29: #{tpu_custom_call.1} parent=11 // pred_check
          %p266 = pneg %p152
        $region30: #{tpu_custom_call.1} parent=11 // pred_check_branch
          %268 = sbr.rel (%p266) target = $region32
        $region31: #{tpu_custom_call.1} parent=11 // pred_region
          _
        $region32: #{tpu_custom_call.1} parent=11 // pred_fallthru
          _
        // Predicated region
        $region33: #{tpu_custom_call.1} parent=11 // pred_check
          %p269 = pneg %p173
        $region34: #{tpu_custom_call.1} parent=11 // pred_check_branch
          %271 = sbr.rel (%p269) target = $region36
        $region35: #{tpu_custom_call.1} parent=11 // pred_region
          _
        $region36: #{tpu_custom_call.1} parent=11 // pred_fallthru
          _
      $region12: #{tpu_custom_call.1} parent=5 // pred_fallthru
        _
      %p272 = scmp.lt.s32.totalorder %s21, 2
      // Predicated region
      $region37: #{tpu_custom_call.1} parent=5 // pred_check
        %p273 = pneg %p272
      $region38: #{tpu_custom_call.1} parent=5 // pred_check_branch
        %275 = sbr.rel (%p273) target = $region40
      $region39: #{tpu_custom_call.1} parent=5 // pred_region
        // Predicated region
        $region41: #{tpu_custom_call.1} parent=39 // pred_check
          %p276 = pneg %p41
        $region42: #{tpu_custom_call.1} parent=39 // pred_check_branch
          %278 = sbr.rel (%p276) target = $region44
        $region43: #{tpu_custom_call.1} parent=39 // pred_region
          %s279 = sand.u32 %s31, 1
          %s280 = scalar_lea.sflag [#allocation3], %s279
          %s281 = sand.u32 %s31, 1
          %s282 = smul.addr %s281, 16
          %s283 = scalar_lea.vmem [#allocation2], %s282
          %s284 = smul.u32 2, %s21
          %s286 = ssub.s32 256, 256
          %287 = vsyncadd %s280, %s286
          %s288 = smul.addr %s284, 128
          %s289 = scalar_lea.hbm %s0, %s288
          %s290 = sshll.u32 %s283, 4
          %s291 = int_to_ptr.vmem [resolvable:$true] %s290
          %296 = dma.hbm_to_vmem [thread:$0]  %s289, 256, %s291, %s280, 128, 128, 8
        $region44: #{tpu_custom_call.1} parent=39 // pred_fallthru
          _
      $region40: #{tpu_custom_call.1} parent=5 // pred_fallthru
        _
      %p297 = scmp.le.s32.totalorder 1, %s21
      %p298 = scmp.lt.s32.totalorder %s21, 3
      %p299 = pnand %p297, %p298
      %p300 = pneg %p299
      // Predicated region
      $region45: #{tpu_custom_call.1} parent=5 // pred_check
        _
      $region46: #{tpu_custom_call.1} parent=5 // pred_check_branch
        %302 = sbr.rel (%p299) target = $region48
      $region47: #{tpu_custom_call.1} parent=5 // pred_region
        %s303 = ssub.s32 %s21, 1
        %s304 = sand.u32 %s34, 1
        %s305 = scalar_lea.sflag [#allocation3], %s304
        %s306 = sand.u32 %s34, 1
        %s307 = smul.addr %s306, 16
        %s308 = scalar_lea.vmem [#allocation2], %s307
        // Predicated region
        $region49: #{tpu_custom_call.1} parent=47 // pred_check
          %p309 = pneg %p47
        $region50: #{tpu_custom_call.1} parent=47 // pred_check_branch
          %311 = sbr.rel (%p309) target = $region52
        $region51: #{tpu_custom_call.1} parent=47 // pred_region
          %312 = dma.done %s305, 256
        $region52: #{tpu_custom_call.1} parent=47 // pred_fallthru
          _
        // Predicated region
        $region53: #{tpu_custom_call.1} parent=47 // pred_check
          %p313 = pneg %p68
        $region54: #{tpu_custom_call.1} parent=47 // pred_check_branch
          %315 = sbr.rel (%p313) target = $region56
        $region55: #{tpu_custom_call.1} parent=47 // pred_region
          %316 = dma.done [#allocation6], 4096
        $region56: #{tpu_custom_call.1} parent=47 // pred_fallthru
          _
        // Predicated region
        $region57: #{tpu_custom_call.1} parent=47 // pred_check
          %p317 = pneg %p89
        $region58: #{tpu_custom_call.1} parent=47 // pred_check_branch
          %319 = sbr.rel (%p317) target = $region60
        $region59: #{tpu_custom_call.1} parent=47 // pred_region
          %320 = dma.done [#allocation6], 8192
        $region60: #{tpu_custom_call.1} parent=47 // pred_fallthru
          _
        // Predicated region
        $region61: #{tpu_custom_call.1} parent=47 // pred_check
          %p321 = pneg %p110
        $region62: #{tpu_custom_call.1} parent=47 // pred_check_branch
          %323 = sbr.rel (%p321) target = $region64
        $region63: #{tpu_custom_call.1} parent=47 // pred_region
          %324 = dma.done [#allocation9], 8192
        $region64: #{tpu_custom_call.1} parent=47 // pred_fallthru
          _
        // Predicated region
        $region65: #{tpu_custom_call.1} parent=47 // pred_check
          %p325 = pneg %p131
        $region66: #{tpu_custom_call.1} parent=47 // pred_check_branch
          %327 = sbr.rel (%p325) target = $region68
        $region67: #{tpu_custom_call.1} parent=47 // pred_region
          %328 = dma.done [#allocation9], 8192
        $region68: #{tpu_custom_call.1} parent=47 // pred_fallthru
          _
        %s329 = sand.u32 %s34, 1
        %s330 = scalar_lea.sflag [#allocation3], %s329
        %s331 = sand.u32 %s34, 1
        %s332 = smul.addr %s331, 16
        %s333 = scalar_lea.vmem [#allocation2], %s332
        %p334 = pneg %p47
        %p335 = pneg %p44
        %p336 = pneg %p68
        %p337 = pneg %p65
        %p338 = pneg %p89
        %p339 = pneg %p86
        %p340 = pneg %p110
        %p341 = pneg %p107
        %p342 = pneg %p131
        %p343 = pneg %p128
        %p344 = pneg %p152
        %p345 = pneg %p149
        %p346 = pneg %p173
        %p347 = pneg %p170
        %p348 = pneg %p199
        %p349 = pneg %p196
        %s350 = sand.u32 %s186, 1
        %s351 = scalar_lea.sflag [#allocation4], %s350
        %s352 = sand.u32 %s186, 1
        %s353 = smul.addr %s352, 32
        %s354 = scalar_lea.vmem [#allocation11], %s353
        %s355 = smul.u32 2, %s26
        %s356 = smul.u32 2, %s26
        %v357 = vld [vmem:[%s308] sm:$0xff]
        %v358 = vld [vmem:[%s308 + $0x8] sm:$0xff]
        %v359 = vld [vmem:[%s5] sm:$0xf]
        %v360 = vld [vmem:[%s6] sm:$0x77]
        %v361 = vld [vmem:[#allocation10] sm:$0xff]
        %v362 = vld [vmem:[#allocation10 + $0x8] sm:$0xff]
        %v363 = vld [vmem:[#allocation10 + $0x10] sm:$0xff]
        %v364 = vld [vmem:[#allocation10 + $0x18] sm:$0xff]
        %v365 = vld [vmem:[#allocation10 + $0x20] sm:$0xff]
        %v366 = vld [vmem:[#allocation10 + $0x28] sm:$0xff]
        %v367 = vld [vmem:[#allocation10 + $0x30] sm:$0xff]
        %v368 = vld [vmem:[#allocation10 + $0x38] sm:$0xff]
        %v369 = vld [vmem:[#allocation10 + $0x40] sm:$0xff]
        %v370 = vld [vmem:[#allocation10 + $0x48] sm:$0xff]
        %v371 = vld [vmem:[#allocation10 + $0x50] sm:$0xff]
        %v372 = vld [vmem:[#allocation10 + $0x58] sm:$0xff]
        %v373 = vld [vmem:[#allocation10 + $0x60] sm:$0xff]
        %v374 = vld [vmem:[#allocation10 + $0x68] sm:$0xff]
        %v375 = vld [vmem:[#allocation10 + $0x70] sm:$0xff]
        %v376 = vld [vmem:[#allocation10 + $0x78] sm:$0xff]
        %v377 = vld [vmem:[#allocation10 + $0x80] sm:$0xff]
        %v378 = vld [vmem:[#allocation10 + $0x88] sm:$0xff]
        %v379 = vld [vmem:[#allocation10 + $0x90] sm:$0xff]
        %v380 = vld [vmem:[#allocation10 + $0x98] sm:$0xff]
        %v381 = vld [vmem:[#allocation10 + $0xa0] sm:$0xff]
        %v382 = vld [vmem:[#allocation10 + $0xa8] sm:$0xff]
        %v383 = vld [vmem:[#allocation10 + $0xb0] sm:$0xff]
        %v384 = vld [vmem:[#allocation10 + $0xb8] sm:$0xff]
        %v385 = vld [vmem:[#allocation10 + $0xc0] sm:$0xff]
        %v386 = vld [vmem:[#allocation10 + $0xc8] sm:$0xff]
        %v387 = vld [vmem:[#allocation10 + $0xd0] sm:$0xff]
        %v388 = vld [vmem:[#allocation10 + $0xd8] sm:$0xff]
        %v389 = vld [vmem:[#allocation10 + $0xe0] sm:$0xff]
        %v390 = vld [vmem:[#allocation10 + $0xe8] sm:$0xff]
        %v391 = vld [vmem:[#allocation10 + $0xf0] sm:$0xff]
        %v392 = vld [vmem:[#allocation10 + $0xf8] sm:$0xff]
        %v393 = vld [vmem:[#allocation10 + $0x100] sm:$0xff]
        %v394 = vld [vmem:[#allocation10 + $0x108] sm:$0xff]
        %v395 = vld [vmem:[#allocation10 + $0x110] sm:$0xff]
        %v396 = vld [vmem:[#allocation10 + $0x118] sm:$0xff]
        %v397 = vld [vmem:[#allocation10 + $0x120] sm:$0xff]
        %v398 = vld [vmem:[#allocation10 + $0x128] sm:$0xff]
        %v399 = vld [vmem:[#allocation10 + $0x130] sm:$0xff]
        %v400 = vld [vmem:[#allocation10 + $0x138] sm:$0xff]
        %v401 = vld [vmem:[#allocation10 + $0x140] sm:$0xff]
        %v402 = vld [vmem:[#allocation10 + $0x148] sm:$0xff]
        %v403 = vld [vmem:[#allocation10 + $0x150] sm:$0xff]
        %v404 = vld [vmem:[#allocation10 + $0x158] sm:$0xff]
        %v405 = vld [vmem:[#allocation10 + $0x160] sm:$0xff]
        %v406 = vld [vmem:[#allocation10 + $0x168] sm:$0xff]
        %v407 = vld [vmem:[#allocation10 + $0x170] sm:$0xff]
        %v408 = vld [vmem:[#allocation10 + $0x178] sm:$0xff]
        %v409 = vld [vmem:[#allocation10 + $0x180] sm:$0xff]
        %v410 = vld [vmem:[#allocation10 + $0x188] sm:$0xff]
        %v411 = vld [vmem:[#allocation10 + $0x190] sm:$0xff]
        %v412 = vld [vmem:[#allocation10 + $0x198] sm:$0xff]
        %v413 = vld [vmem:[#allocation10 + $0x1a0] sm:$0xff]
        %v414 = vld [vmem:[#allocation10 + $0x1a8] sm:$0xff]
        %v415 = vld [vmem:[#allocation10 + $0x1b0] sm:$0xff]
        %v416 = vld [vmem:[#allocation10 + $0x1b8] sm:$0xff]
        %v417 = vld [vmem:[#allocation10 + $0x1c0] sm:$0xff]
        %v418 = vld [vmem:[#allocation10 + $0x1c8] sm:$0xff]
        %v419 = vld [vmem:[#allocation10 + $0x1d0] sm:$0xff]
        %v420 = vld [vmem:[#allocation10 + $0x1d8] sm:$0xff]
        %v421 = vld [vmem:[#allocation10 + $0x1e0] sm:$0xff]
        %v422 = vld [vmem:[#allocation10 + $0x1e8] sm:$0xff]
        %v423 = vld [vmem:[#allocation10 + $0x1f0] sm:$0xff]
        %v424 = vld [vmem:[#allocation10 + $0x1f8] sm:$0xff]
        %v425 = vld [vmem:[#allocation5] sm:$0xff]
        %v426 = vld [vmem:[#allocation5 + $0x8] sm:$0xff]
        %v427 = vld [vmem:[#allocation5 + $0x10] sm:$0xff]
        %v428 = vld [vmem:[#allocation5 + $0x18] sm:$0xff]
        %v429 = vld [vmem:[#allocation5 + $0x20] sm:$0xff]
        %v430 = vld [vmem:[#allocation5 + $0x28] sm:$0xff]
        %v431 = vld [vmem:[#allocation5 + $0x30] sm:$0xff]
        %v432 = vld [vmem:[#allocation5 + $0x38] sm:$0xff]
        %v433 = vld [vmem:[#allocation5 + $0x40] sm:$0xff]
        %v434 = vld [vmem:[#allocation5 + $0x48] sm:$0xff]
        %v435 = vld [vmem:[#allocation5 + $0x50] sm:$0xff]
        %v436 = vld [vmem:[#allocation5 + $0x58] sm:$0xff]
        %v437 = vld [vmem:[#allocation5 + $0x60] sm:$0xff]
        %v438 = vld [vmem:[#allocation5 + $0x68] sm:$0xff]
        %v439 = vld [vmem:[#allocation5 + $0x70] sm:$0xff]
        %v440 = vld [vmem:[#allocation5 + $0x78] sm:$0xff]
        %v441 = vld [vmem:[#allocation5 + $0x80] sm:$0xff]
        %v442 = vld [vmem:[#allocation5 + $0x88] sm:$0xff]
        %v443 = vld [vmem:[#allocation5 + $0x90] sm:$0xff]
        %v444 = vld [vmem:[#allocation5 + $0x98] sm:$0xff]
        %v445 = vld [vmem:[#allocation5 + $0xa0] sm:$0xff]
        %v446 = vld [vmem:[#allocation5 + $0xa8] sm:$0xff]
        %v447 = vld [vmem:[#allocation5 + $0xb0] sm:$0xff]
        %v448 = vld [vmem:[#allocation5 + $0xb8] sm:$0xff]
        %v449 = vld [vmem:[#allocation5 + $0xc0] sm:$0xff]
        %v450 = vld [vmem:[#allocation5 + $0xc8] sm:$0xff]
        %v451 = vld [vmem:[#allocation5 + $0xd0] sm:$0xff]
        %v452 = vld [vmem:[#allocation5 + $0xd8] sm:$0xff]
        %v453 = vld [vmem:[#allocation5 + $0xe0] sm:$0xff]
        %v454 = vld [vmem:[#allocation5 + $0xe8] sm:$0xff]
        %v455 = vld [vmem:[#allocation5 + $0xf0] sm:$0xff]
        %v456 = vld [vmem:[#allocation5 + $0xf8] sm:$0xff]
        %v458 = vlaneseq
        %v459 = vshrl.u32 %v458, 7
        %v460 = vsub.s32 0, %v459
        %v461 = vrot.slane %v359, %v460
        %v462 = vlaneseq
        %v463 = vshrl.u32 %v462, 7
        %v464 = vsub.s32 2, %v463
        %v465 = vrot.slane %v359, %v464
        %v468 = vlaneseq
        %v469 = vshrl.u32 %v468, 7
        %v470 = vsub.s32 0, %v469
        %v471 = vrot.slane %v461, %v470
        %v472 = vlaneseq
        %v473 = vshrl.u32 %v472, 7
        %v474 = vsub.s32 0, %v473
        %v475 = vrot.slane %v465, %v474
        %476 = vmatprep.subr.mxu0 %v426
        %477 = vmatpush1.msra.mxu0 %v425
        %478 = vmatprep.subr.mxu0 %v428
        %479 = vmatpush1.msra.mxu0 %v427
        %480 = vmatprep.subr.mxu0 %v430
        %481 = vmatpush1.msra.mxu0 %v429
        %482 = vmatprep.subr.mxu0 %v432
        %483 = vmatpush1.msra.mxu0 %v431
        %484 = vmatprep.subr.mxu0 %v434
        %485 = vmatpush1.msra.mxu0 %v433
        %486 = vmatprep.subr.mxu0 %v436
        %487 = vmatpush1.msra.mxu0 %v435
        %488 = vmatprep.subr.mxu0 %v438
        %489 = vmatpush1.msra.mxu0 %v437
        %490 = vmatprep.subr.mxu0 %v440
        %491 = vmatpush1.msra.mxu0 %v439
        %492 = vmatprep.subr.mxu0 %v442
        %493 = vmatpush1.msra.mxu0 %v441
        %494 = vmatprep.subr.mxu0 %v444
        %495 = vmatpush1.msra.mxu0 %v443
        %496 = vmatprep.subr.mxu0 %v446
        %497 = vmatpush1.msra.mxu0 %v445
        %498 = vmatprep.subr.mxu0 %v448
        %499 = vmatpush1.msra.mxu0 %v447
        %500 = vmatprep.subr.mxu0 %v450
        %501 = vmatpush1.msra.mxu0 %v449
        %502 = vmatprep.subr.mxu0 %v452
        %503 = vmatpush1.msra.mxu0 %v451
        %504 = vmatprep.subr.mxu0 %v454
        %505 = vmatpush1.msra.mxu0 %v453
        %506 = vmatprep.subr.mxu0 %v456
        %507 = vmatpush1.msra.mxu0 %v455
        %508 = vmatprep.subr.mxu0 0.0
        %509 = vmatpush1.msra.mxu0 0.0
        %510 = vmatprep.subr.mxu0 0.0
        %511 = vmatpush1.msra.mxu0 0.0
        %512 = vmatprep.subr.mxu0 0.0
        %513 = vmatpush1.msra.mxu0 0.0
        %514 = vmatprep.subr.mxu0 0.0
        %515 = vmatpush1.msra.mxu0 0.0
        %516 = vmatprep.subr.mxu0 0.0
        %517 = vmatpush1.msra.mxu0 0.0
        %518 = vmatprep.subr.mxu0 0.0
        %519 = vmatpush1.msra.mxu0 0.0
        %520 = vmatprep.subr.mxu0 0.0
        %521 = vmatpush1.msra.mxu0 0.0
        %522 = vmatprep.subr.mxu0 0.0
        %523 = vmatpush1.msra.mxu0 0.0
        %524 = vmatprep.subr.mxu0 0.0
        %525 = vmatpush1.msra.mxu0 0.0
        %526 = vmatprep.subr.mxu0 0.0
        %527 = vmatpush1.msra.mxu0 0.0
        %528 = vmatprep.subr.mxu0 0.0
        %529 = vmatpush1.msra.mxu0 0.0
        %530 = vmatprep.subr.mxu0 0.0
        %531 = vmatpush1.msra.mxu0 0.0
        %532 = vmatprep.subr.mxu0 0.0
        %533 = vmatpush1.msra.mxu0 0.0
        %534 = vmatprep.subr.mxu0 0.0
        %535 = vmatpush1.msra.mxu0 0.0
        %536 = vmatprep.subr.mxu0 0.0
        %537 = vmatpush1.msra.mxu0 0.0
        %538 = vmatprep.subr.mxu0 0.0
        %539 = vmatpush1.msra.mxu0 0.0
        %540 = vmatprep.mubr.f32.mxu0 0.0
        %541 = vmatmul.mubr.f32.gmra.mrb[0].mxu0 %v357
        %v542 = vpop.f32.mrb[0].mxu0
        %v543 = vadd.f32 %v471, %v542
        %v544 = vpop.f32.mrb[0].mxu0
        %v545 = vadd.f32 %v475, %v544
        %546 = vmatprep.mubr.f32.mxu0 0.0
        %547 = vmatmul.mubr.f32.gmra.mrb[0].mxu0 %v358
        %v548 = vpop.f32.mrb[0].mxu0
        %v549 = vadd.f32 %v471, %v548
        %v550 = vpop.f32.mrb[0].mxu0
        %v551 = vadd.f32 %v475, %v550
        %552 = vdwg.mxu0
        %v553 = vmax.f32 %v543, 0.0
        %v554 = vmax.f32 %v545, 0.0
        %v555 = vmax.f32 %v549, 0.0
        %v556 = vmax.f32 %v551, 0.0
        %v557 = vld [vmem:[#allocation7] sm:$0xff]
        %v558 = vld [vmem:[#allocation7 + $0x8] sm:$0xff]
        %v559 = vld [vmem:[#allocation7 + $0x10] sm:$0xff]
        %v560 = vld [vmem:[#allocation7 + $0x18] sm:$0xff]
        %v561 = vld [vmem:[#allocation7 + $0x20] sm:$0xff]
        %v562 = vld [vmem:[#allocation7 + $0x28] sm:$0xff]
        %v563 = vld [vmem:[#allocation7 + $0x30] sm:$0xff]
        %v564 = vld [vmem:[#allocation7 + $0x38] sm:$0xff]
        %v565 = vld [vmem:[#allocation7 + $0x40] sm:$0xff]
        %v566 = vld [vmem:[#allocation7 + $0x48] sm:$0xff]
        %v567 = vld [vmem:[#allocation7 + $0x50] sm:$0xff]
        %v568 = vld [vmem:[#allocation7 + $0x58] sm:$0xff]
        %v569 = vld [vmem:[#allocation7 + $0x60] sm:$0xff]
        %v570 = vld [vmem:[#allocation7 + $0x68] sm:$0xff]
        %v571 = vld [vmem:[#allocation7 + $0x70] sm:$0xff]
        %v572 = vld [vmem:[#allocation7 + $0x78] sm:$0xff]
        %v573 = vld [vmem:[#allocation7 + $0x80] sm:$0xff]
        %v574 = vld [vmem:[#allocation7 + $0x88] sm:$0xff]
        %v575 = vld [vmem:[#allocation7 + $0x90] sm:$0xff]
        %v576 = vld [vmem:[#allocation7 + $0x98] sm:$0xff]
        %v577 = vld [vmem:[#allocation7 + $0xa0] sm:$0xff]
        %v578 = vld [vmem:[#allocation7 + $0xa8] sm:$0xff]
        %v579 = vld [vmem:[#allocation7 + $0xb0] sm:$0xff]
        %v580 = vld [vmem:[#allocation7 + $0xb8] sm:$0xff]
        %v581 = vld [vmem:[#allocation7 + $0xc0] sm:$0xff]
        %v582 = vld [vmem:[#allocation7 + $0xc8] sm:$0xff]
        %v583 = vld [vmem:[#allocation7 + $0xd0] sm:$0xff]
        %v584 = vld [vmem:[#allocation7 + $0xd8] sm:$0xff]
        %v585 = vld [vmem:[#allocation7 + $0xe0] sm:$0xff]
        %v586 = vld [vmem:[#allocation7 + $0xe8] sm:$0xff]
        %v587 = vld [vmem:[#allocation7 + $0xf0] sm:$0xff]
        %v588 = vld [vmem:[#allocation7 + $0xf8] sm:$0xff]
        %v589 = vld [vmem:[#allocation7 + $0x100] sm:$0xff]
        %v590 = vld [vmem:[#allocation7 + $0x108] sm:$0xff]
        %v591 = vld [vmem:[#allocation7 + $0x110] sm:$0xff]
        %v592 = vld [vmem:[#allocation7 + $0x118] sm:$0xff]
        %v593 = vld [vmem:[#allocation7 + $0x120] sm:$0xff]
        %v594 = vld [vmem:[#allocation7 + $0x128] sm:$0xff]
        %v595 = vld [vmem:[#allocation7 + $0x130] sm:$0xff]
        %v596 = vld [vmem:[#allocation7 + $0x138] sm:$0xff]
        %v597 = vld [vmem:[#allocation7 + $0x140] sm:$0xff]
        %v598 = vld [vmem:[#allocation7 + $0x148] sm:$0xff]
        %v599 = vld [vmem:[#allocation7 + $0x150] sm:$0xff]
        %v600 = vld [vmem:[#allocation7 + $0x158] sm:$0xff]
        %v601 = vld [vmem:[#allocation7 + $0x160] sm:$0xff]
        %v602 = vld [vmem:[#allocation7 + $0x168] sm:$0xff]
        %v603 = vld [vmem:[#allocation7 + $0x170] sm:$0xff]
        %v604 = vld [vmem:[#allocation7 + $0x178] sm:$0xff]
        %v605 = vld [vmem:[#allocation7 + $0x180] sm:$0xff]
        %v606 = vld [vmem:[#allocation7 + $0x188] sm:$0xff]
        %v607 = vld [vmem:[#allocation7 + $0x190] sm:$0xff]
        %v608 = vld [vmem:[#allocation7 + $0x198] sm:$0xff]
        %v609 = vld [vmem:[#allocation7 + $0x1a0] sm:$0xff]
        %v610 = vld [vmem:[#allocation7 + $0x1a8] sm:$0xff]
        %v611 = vld [vmem:[#allocation7 + $0x1b0] sm:$0xff]
        %v612 = vld [vmem:[#allocation7 + $0x1b8] sm:$0xff]
        %v613 = vld [vmem:[#allocation7 + $0x1c0] sm:$0xff]
        %v614 = vld [vmem:[#allocation7 + $0x1c8] sm:$0xff]
        %v615 = vld [vmem:[#allocation7 + $0x1d0] sm:$0xff]
        %v616 = vld [vmem:[#allocation7 + $0x1d8] sm:$0xff]
        %v617 = vld [vmem:[#allocation7 + $0x1e0] sm:$0xff]
        %v618 = vld [vmem:[#allocation7 + $0x1e8] sm:$0xff]
        %v619 = vld [vmem:[#allocation7 + $0x1f0] sm:$0xff]
        %v620 = vld [vmem:[#allocation7 + $0x1f8] sm:$0xff]
        %v621 = vlaneseq
        %v622 = vshrl.u32 %v621, 7
        %v623 = vsub.s32 1, %v622
        %v624 = vrot.slane %v359, %v623
        %v625 = vlaneseq
        %v626 = vshrl.u32 %v625, 7
        %v627 = vsub.s32 3, %v626
        %v628 = vrot.slane %v359, %v627
        %v631 = vlaneseq
        %v632 = vshrl.u32 %v631, 7
        %v633 = vsub.s32 1, %v632
        %v634 = vrot.slane %v624, %v633
        %v635 = vlaneseq
        %v636 = vshrl.u32 %v635, 7
        %v637 = vsub.s32 1, %v636
        %v638 = vrot.slane %v628, %v637
        %639 = vmatprep.subr.mxu0 %v558
        %640 = vmatpush1.msra.mxu0 %v557
        %641 = vmatprep.subr.mxu0 %v560
        %642 = vmatpush1.msra.mxu0 %v559
        %643 = vmatprep.subr.mxu0 %v562
        %644 = vmatpush1.msra.mxu0 %v561
        %645 = vmatprep.subr.mxu0 %v564
        %646 = vmatpush1.msra.mxu0 %v563
        %647 = vmatprep.subr.mxu0 %v566
        %648 = vmatpush1.msra.mxu0 %v565
        %649 = vmatprep.subr.mxu0 %v568
        %650 = vmatpush1.msra.mxu0 %v567
        %651 = vmatprep.subr.mxu0 %v570
        %652 = vmatpush1.msra.mxu0 %v569
        %653 = vmatprep.subr.mxu0 %v572
        %654 = vmatpush1.msra.mxu0 %v571
        %655 = vmatprep.subr.mxu0 %v574
        %656 = vmatpush1.msra.mxu0 %v573
        %657 = vmatprep.subr.mxu0 %v576
        %658 = vmatpush1.msra.mxu0 %v575
        %659 = vmatprep.subr.mxu0 %v578
        %660 = vmatpush1.msra.mxu0 %v577
        %661 = vmatprep.subr.mxu0 %v580
        %662 = vmatpush1.msra.mxu0 %v579
        %663 = vmatprep.subr.mxu0 %v582
        %664 = vmatpush1.msra.mxu0 %v581
        %665 = vmatprep.subr.mxu0 %v584
        %666 = vmatpush1.msra.mxu0 %v583
        %667 = vmatprep.subr.mxu0 %v586
        %668 = vmatpush1.msra.mxu0 %v585
        %669 = vmatprep.subr.mxu0 %v588
        %670 = vmatpush1.msra.mxu0 %v587
        %671 = vmatprep.subr.mxu0 %v590
        %672 = vmatpush1.msra.mxu0 %v589
        %673 = vmatprep.subr.mxu0 %v592
        %674 = vmatpush1.msra.mxu0 %v591
        %675 = vmatprep.subr.mxu0 %v594
        %676 = vmatpush1.msra.mxu0 %v593
        %677 = vmatprep.subr.mxu0 %v596
        %678 = vmatpush1.msra.mxu0 %v595
        %679 = vmatprep.subr.mxu0 %v598
        %680 = vmatpush1.msra.mxu0 %v597
        %681 = vmatprep.subr.mxu0 %v600
        %682 = vmatpush1.msra.mxu0 %v599
        %683 = vmatprep.subr.mxu0 %v602
        %684 = vmatpush1.msra.mxu0 %v601
        %685 = vmatprep.subr.mxu0 %v604
        %686 = vmatpush1.msra.mxu0 %v603
        %687 = vmatprep.subr.mxu0 %v606
        %688 = vmatpush1.msra.mxu0 %v605
        %689 = vmatprep.subr.mxu0 %v608
        %690 = vmatpush1.msra.mxu0 %v607
        %691 = vmatprep.subr.mxu0 %v610
        %692 = vmatpush1.msra.mxu0 %v609
        %693 = vmatprep.subr.mxu0 %v612
        %694 = vmatpush1.msra.mxu0 %v611
        %695 = vmatprep.subr.mxu0 %v614
        %696 = vmatpush1.msra.mxu0 %v613
        %697 = vmatprep.subr.mxu0 %v616
        %698 = vmatpush1.msra.mxu0 %v615
        %699 = vmatprep.subr.mxu0 %v618
        %700 = vmatpush1.msra.mxu0 %v617
        %701 = vmatprep.subr.mxu0 %v620
        %702 = vmatpush1.msra.mxu0 %v619
        %703 = vmatprep.mubr.f32.mxu0 %v554
        %704 = vmatmul.mubr.f32.gmra.mrb[0].mxu0 %v553
        %v705 = vpop.f32.mrb[0].mxu0
        %v706 = vadd.f32 %v634, %v705
        %v707 = vpop.f32.mrb[0].mxu0
        %v708 = vadd.f32 %v638, %v707
        %709 = vmatprep.mubr.f32.mxu0 %v556
        %710 = vmatmul.mubr.f32.gmra.mrb[0].mxu0 %v555
        %v711 = vpop.f32.mrb[0].mxu0
        %v712 = vadd.f32 %v634, %v711
        %v713 = vpop.f32.mrb[0].mxu0
        %v714 = vadd.f32 %v638, %v713
        %715 = vdwg.mxu0
        %v716 = vmax.f32 %v706, 0.0
        %v717 = vmax.f32 %v708, 0.0
        %v718 = vmax.f32 %v712, 0.0
        %v719 = vmax.f32 %v714, 0.0
        %v720 = vld [vmem:[#allocation8] sm:$0xff]
        %v721 = vld [vmem:[#allocation8 + $0x8] sm:$0xff]
        %v722 = vld [vmem:[#allocation8 + $0x10] sm:$0xff]
        %v723 = vld [vmem:[#allocation8 + $0x18] sm:$0xff]
        %v724 = vld [vmem:[#allocation8 + $0x20] sm:$0xff]
        %v725 = vld [vmem:[#allocation8 + $0x28] sm:$0xff]
        %v726 = vld [vmem:[#allocation8 + $0x30] sm:$0xff]
        %v727 = vld [vmem:[#allocation8 + $0x38] sm:$0xff]
        %v728 = vld [vmem:[#allocation8 + $0x40] sm:$0xff]
        %v729 = vld [vmem:[#allocation8 + $0x48] sm:$0xff]
        %v730 = vld [vmem:[#allocation8 + $0x50] sm:$0xff]
        %v731 = vld [vmem:[#allocation8 + $0x58] sm:$0xff]
        %v732 = vld [vmem:[#allocation8 + $0x60] sm:$0xff]
        %v733 = vld [vmem:[#allocation8 + $0x68] sm:$0xff]
        %v734 = vld [vmem:[#allocation8 + $0x70] sm:$0xff]
        %v735 = vld [vmem:[#allocation8 + $0x78] sm:$0xff]
        %v736 = vld [vmem:[#allocation8 + $0x80] sm:$0xff]
        %v737 = vld [vmem:[#allocation8 + $0x88] sm:$0xff]
        %v738 = vld [vmem:[#allocation8 + $0x90] sm:$0xff]
        %v739 = vld [vmem:[#allocation8 + $0x98] sm:$0xff]
        %v740 = vld [vmem:[#allocation8 + $0xa0] sm:$0xff]
        %v741 = vld [vmem:[#allocation8 + $0xa8] sm:$0xff]
        %v742 = vld [vmem:[#allocation8 + $0xb0] sm:$0xff]
        %v743 = vld [vmem:[#allocation8 + $0xb8] sm:$0xff]
        %v744 = vld [vmem:[#allocation8 + $0xc0] sm:$0xff]
        %v745 = vld [vmem:[#allocation8 + $0xc8] sm:$0xff]
        %v746 = vld [vmem:[#allocation8 + $0xd0] sm:$0xff]
        %v747 = vld [vmem:[#allocation8 + $0xd8] sm:$0xff]
        %v748 = vld [vmem:[#allocation8 + $0xe0] sm:$0xff]
        %v749 = vld [vmem:[#allocation8 + $0xe8] sm:$0xff]
        %v750 = vld [vmem:[#allocation8 + $0xf0] sm:$0xff]
        %v751 = vld [vmem:[#allocation8 + $0xf8] sm:$0xff]
        %v752 = vld [vmem:[#allocation8 + $0x100] sm:$0xff]
        %v753 = vld [vmem:[#allocation8 + $0x108] sm:$0xff]
        %v754 = vld [vmem:[#allocation8 + $0x110] sm:$0xff]
        %v755 = vld [vmem:[#allocation8 + $0x118] sm:$0xff]
        %v756 = vld [vmem:[#allocation8 + $0x120] sm:$0xff]
        %v757 = vld [vmem:[#allocation8 + $0x128] sm:$0xff]
        %v758 = vld [vmem:[#allocation8 + $0x130] sm:$0xff]
        %v759 = vld [vmem:[#allocation8 + $0x138] sm:$0xff]
        %v760 = vld [vmem:[#allocation8 + $0x140] sm:$0xff]
        %v761 = vld [vmem:[#allocation8 + $0x148] sm:$0xff]
        %v762 = vld [vmem:[#allocation8 + $0x150] sm:$0xff]
        %v763 = vld [vmem:[#allocation8 + $0x158] sm:$0xff]
        %v764 = vld [vmem:[#allocation8 + $0x160] sm:$0xff]
        %v765 = vld [vmem:[#allocation8 + $0x168] sm:$0xff]
        %v766 = vld [vmem:[#allocation8 + $0x170] sm:$0xff]
        %v767 = vld [vmem:[#allocation8 + $0x178] sm:$0xff]
        %v768 = vld [vmem:[#allocation8 + $0x180] sm:$0xff]
        %v769 = vld [vmem:[#allocation8 + $0x188] sm:$0xff]
        %v770 = vld [vmem:[#allocation8 + $0x190] sm:$0xff]
        %v771 = vld [vmem:[#allocation8 + $0x198] sm:$0xff]
        %v772 = vld [vmem:[#allocation8 + $0x1a0] sm:$0xff]
        %v773 = vld [vmem:[#allocation8 + $0x1a8] sm:$0xff]
        %v774 = vld [vmem:[#allocation8 + $0x1b0] sm:$0xff]
        %v775 = vld [vmem:[#allocation8 + $0x1b8] sm:$0xff]
        %v776 = vld [vmem:[#allocation8 + $0x1c0] sm:$0xff]
        %v777 = vld [vmem:[#allocation8 + $0x1c8] sm:$0xff]
        %v778 = vld [vmem:[#allocation8 + $0x1d0] sm:$0xff]
        %v779 = vld [vmem:[#allocation8 + $0x1d8] sm:$0xff]
        %v780 = vld [vmem:[#allocation8 + $0x1e0] sm:$0xff]
        %v781 = vld [vmem:[#allocation8 + $0x1e8] sm:$0xff]
        %v782 = vld [vmem:[#allocation8 + $0x1f0] sm:$0xff]
        %v783 = vld [vmem:[#allocation8 + $0x1f8] sm:$0xff]
        %v785 = vlaneseq
        %v786 = vshrl.u32 %v785, 7
        %v787 = vsub.s32 0, %v786
        %v788 = vrot.slane %v360, %v787
        %v789 = vlaneseq
        %v790 = vshrl.u32 %v789, 7
        %v791 = vsub.s32 4, %v790
        %v792 = vrot.slane %v360, %v791
        %v795 = vlaneseq
        %v796 = vshrl.u32 %v795, 7
        %v797 = vsub.s32 0, %v796
        %v798 = vrot.slane %v788, %v797
        %v799 = vlaneseq
        %v800 = vshrl.u32 %v799, 7
        %v801 = vsub.s32 0, %v800
        %v802 = vrot.slane %v792, %v801
        %803 = vmatprep.subr.mxu0 %v721
        %804 = vmatpush1.msra.mxu0 %v720
        %805 = vmatprep.subr.mxu0 %v723
        %806 = vmatpush1.msra.mxu0 %v722
        %807 = vmatprep.subr.mxu0 %v725
        %808 = vmatpush1.msra.mxu0 %v724
        %809 = vmatprep.subr.mxu0 %v727
        %810 = vmatpush1.msra.mxu0 %v726
        %811 = vmatprep.subr.mxu0 %v729
        %812 = vmatpush1.msra.mxu0 %v728
        %813 = vmatprep.subr.mxu0 %v731
        %814 = vmatpush1.msra.mxu0 %v730
        %815 = vmatprep.subr.mxu0 %v733
        %816 = vmatpush1.msra.mxu0 %v732
        %817 = vmatprep.subr.mxu0 %v735
        %818 = vmatpush1.msra.mxu0 %v734
        %819 = vmatprep.subr.mxu0 %v737
        %820 = vmatpush1.msra.mxu0 %v736
        %821 = vmatprep.subr.mxu0 %v739
        %822 = vmatpush1.msra.mxu0 %v738
        %823 = vmatprep.subr.mxu0 %v741
        %824 = vmatpush1.msra.mxu0 %v740
        %825 = vmatprep.subr.mxu0 %v743
        %826 = vmatpush1.msra.mxu0 %v742
        %827 = vmatprep.subr.mxu0 %v745
        %828 = vmatpush1.msra.mxu0 %v744
        %829 = vmatprep.subr.mxu0 %v747
        %830 = vmatpush1.msra.mxu0 %v746
        %831 = vmatprep.subr.mxu0 %v749
        %832 = vmatpush1.msra.mxu0 %v748
        %833 = vmatprep.subr.mxu0 %v751
        %834 = vmatpush1.msra.mxu0 %v750
        %835 = vmatprep.subr.mxu0 %v753
        %836 = vmatpush1.msra.mxu0 %v752
        %837 = vmatprep.subr.mxu0 %v755
        %838 = vmatpush1.msra.mxu0 %v754
        %839 = vmatprep.subr.mxu0 %v757
        %840 = vmatpush1.msra.mxu0 %v756
        %841 = vmatprep.subr.mxu0 %v759
        %842 = vmatpush1.msra.mxu0 %v758
        %843 = vmatprep.subr.mxu0 %v761
        %844 = vmatpush1.msra.mxu0 %v760
        %845 = vmatprep.subr.mxu0 %v763
        %846 = vmatpush1.msra.mxu0 %v762
        %847 = vmatprep.subr.mxu0 %v765
        %848 = vmatpush1.msra.mxu0 %v764
        %849 = vmatprep.subr.mxu0 %v767
        %850 = vmatpush1.msra.mxu0 %v766
        %851 = vmatprep.subr.mxu0 %v769
        %852 = vmatpush1.msra.mxu0 %v768
        %853 = vmatprep.subr.mxu0 %v771
        %854 = vmatpush1.msra.mxu0 %v770
        %855 = vmatprep.subr.mxu0 %v773
        %856 = vmatpush1.msra.mxu0 %v772
        %857 = vmatprep.subr.mxu0 %v775
        %858 = vmatpush1.msra.mxu0 %v774
        %859 = vmatprep.subr.mxu0 %v777
        %860 = vmatpush1.msra.mxu0 %v776
        %861 = vmatprep.subr.mxu0 %v779
        %862 = vmatpush1.msra.mxu0 %v778
        %863 = vmatprep.subr.mxu0 %v781
        %864 = vmatpush1.msra.mxu0 %v780
        %865 = vmatprep.subr.mxu0 %v783
        %866 = vmatpush1.msra.mxu0 %v782
        %867 = vmatprep.mubr.f32.mxu0 %v717
        %868 = vmatmul.mubr.f32.gmra.mrb[0].mxu0 %v716
        %v869 = vpop.f32.mrb[0].mxu0
        %v870 = vadd.f32 %v798, %v869
        %v871 = vpop.f32.mrb[0].mxu0
        %v872 = vadd.f32 %v802, %v871
        %873 = vmatprep.mubr.f32.mxu0 %v719
        %874 = vmatmul.mubr.f32.gmra.mrb[0].mxu0 %v718
        %v875 = vpop.f32.mrb[0].mxu0
        %v876 = vadd.f32 %v798, %v875
        %v877 = vpop.f32.mrb[0].mxu0
        %v878 = vadd.f32 %v802, %v877
        %879 = vdwg.mxu0
        %880 = vmatprep.subr.mxu0 %v362
        %881 = vmatpush1.msra.mxu0 %v361
        %882 = vmatprep.subr.mxu0 %v364
        %883 = vmatpush1.msra.mxu0 %v363
        %884 = vmatprep.subr.mxu0 %v366
        %885 = vmatpush1.msra.mxu0 %v365
        %886 = vmatprep.subr.mxu0 %v368
        %887 = vmatpush1.msra.mxu0 %v367
        %888 = vmatprep.subr.mxu0 %v370
        %889 = vmatpush1.msra.mxu0 %v369
        %890 = vmatprep.subr.mxu0 %v372
        %891 = vmatpush1.msra.mxu0 %v371
        %892 = vmatprep.subr.mxu0 %v374
        %893 = vmatpush1.msra.mxu0 %v373
        %894 = vmatprep.subr.mxu0 %v376
        %895 = vmatpush1.msra.mxu0 %v375
        %896 = vmatprep.subr.mxu0 %v378
        %897 = vmatpush1.msra.mxu0 %v377
        %898 = vmatprep.subr.mxu0 %v380
        %899 = vmatpush1.msra.mxu0 %v379
        %900 = vmatprep.subr.mxu0 %v382
        %901 = vmatpush1.msra.mxu0 %v381
        %902 = vmatprep.subr.mxu0 %v384
        %903 = vmatpush1.msra.mxu0 %v383
        %904 = vmatprep.subr.mxu0 %v386
        %905 = vmatpush1.msra.mxu0 %v385
        %906 = vmatprep.subr.mxu0 %v388
        %907 = vmatpush1.msra.mxu0 %v387
        %908 = vmatprep.subr.mxu0 %v390
        %909 = vmatpush1.msra.mxu0 %v389
        %910 = vmatprep.subr.mxu0 %v392
        %911 = vmatpush1.msra.mxu0 %v391
        %912 = vmatprep.subr.mxu0 %v394
        %913 = vmatpush1.msra.mxu0 %v393
        %914 = vmatprep.subr.mxu0 %v396
        %915 = vmatpush1.msra.mxu0 %v395
        %916 = vmatprep.subr.mxu0 %v398
        %917 = vmatpush1.msra.mxu0 %v397
        %918 = vmatprep.subr.mxu0 %v400
        %919 = vmatpush1.msra.mxu0 %v399
        %920 = vmatprep.subr.mxu0 %v402
        %921 = vmatpush1.msra.mxu0 %v401
        %922 = vmatprep.subr.mxu0 %v404
        %923 = vmatpush1.msra.mxu0 %v403
        %924 = vmatprep.subr.mxu0 %v406
        %925 = vmatpush1.msra.mxu0 %v405
        %926 = vmatprep.subr.mxu0 %v408
        %927 = vmatpush1.msra.mxu0 %v407
        %928 = vmatprep.subr.mxu0 %v410
        %929 = vmatpush1.msra.mxu0 %v409
        %930 = vmatprep.subr.mxu0 %v412
        %931 = vmatpush1.msra.mxu0 %v411
        %932 = vmatprep.subr.mxu0 %v414
        %933 = vmatpush1.msra.mxu0 %v413
        %934 = vmatprep.subr.mxu0 %v416
        %935 = vmatpush1.msra.mxu0 %v415
        %936 = vmatprep.subr.mxu0 %v418
        %937 = vmatpush1.msra.mxu0 %v417
        %938 = vmatprep.subr.mxu0 %v420
        %939 = vmatpush1.msra.mxu0 %v419
        %940 = vmatprep.subr.mxu0 %v422
        %941 = vmatpush1.msra.mxu0 %v421
        %942 = vmatprep.subr.mxu0 %v424
        %943 = vmatpush1.msra.mxu0 %v423
        %944 = vmatprep.mubr.f32.mxu0 %v872
        %945 = vmatmul.mubr.f32.gmra.mrb[0].mxu0 %v870
        %v946 = vpop.f32.mrb[0].mxu0
        %v947 = vadd.f32 0.0, %v946
        %v948 = vpop.f32.mrb[0].mxu0
        %v949 = vadd.f32 0.0, %v948
        %950 = vmatprep.mubr.f32.mxu0 %v878
        %951 = vmatmul.mubr.f32.gmra.mrb[0].mxu0 %v876
        %v952 = vpop.f32.mrb[0].mxu0
        %v953 = vadd.f32 0.0, %v952
        %v954 = vpop.f32.mrb[0].mxu0
        %v955 = vadd.f32 0.0, %v954
        %956 = vdwg.mxu0
        %v957 = vsub.f32 %v870, %v947
        %v958 = vsub.f32 %v872, %v949
        %v959 = vsub.f32 %v876, %v953
        %v960 = vsub.f32 %v878, %v955
        %v961 = vmul.f32 %v957, %v957
        %v962 = vmul.f32 %v958, %v958
        %v963 = vmul.f32 %v959, %v959
        %v964 = vmul.f32 %v960, %v960
        %965 = vmatprep.subr.mxu0 %v362
        %966 = vmatpush1.msra.mxu0 %v361
        %967 = vmatprep.subr.mxu0 %v364
        %968 = vmatpush1.msra.mxu0 %v363
        %969 = vmatprep.subr.mxu0 %v366
        %970 = vmatpush1.msra.mxu0 %v365
        %971 = vmatprep.subr.mxu0 %v368
        %972 = vmatpush1.msra.mxu0 %v367
        %973 = vmatprep.subr.mxu0 %v370
        %974 = vmatpush1.msra.mxu0 %v369
        %975 = vmatprep.subr.mxu0 %v372
        %976 = vmatpush1.msra.mxu0 %v371
        %977 = vmatprep.subr.mxu0 %v374
        %978 = vmatpush1.msra.mxu0 %v373
        %979 = vmatprep.subr.mxu0 %v376
        %980 = vmatpush1.msra.mxu0 %v375
        %981 = vmatprep.subr.mxu0 %v378
        %982 = vmatpush1.msra.mxu0 %v377
        %983 = vmatprep.subr.mxu0 %v380
        %984 = vmatpush1.msra.mxu0 %v379
        %985 = vmatprep.subr.mxu0 %v382
        %986 = vmatpush1.msra.mxu0 %v381
        %987 = vmatprep.subr.mxu0 %v384
        %988 = vmatpush1.msra.mxu0 %v383
        %989 = vmatprep.subr.mxu0 %v386
        %990 = vmatpush1.msra.mxu0 %v385
        %991 = vmatprep.subr.mxu0 %v388
        %992 = vmatpush1.msra.mxu0 %v387
        %993 = vmatprep.subr.mxu0 %v390
        %994 = vmatpush1.msra.mxu0 %v389
        %995 = vmatprep.subr.mxu0 %v392
        %996 = vmatpush1.msra.mxu0 %v391
        %997 = vmatprep.subr.mxu0 %v394
        %998 = vmatpush1.msra.mxu0 %v393
        %999 = vmatprep.subr.mxu0 %v396
        %1000 = vmatpush1.msra.mxu0 %v395
        %1001 = vmatprep.subr.mxu0 %v398
        %1002 = vmatpush1.msra.mxu0 %v397
        %1003 = vmatprep.subr.mxu0 %v400
        %1004 = vmatpush1.msra.mxu0 %v399
        %1005 = vmatprep.subr.mxu0 %v402
        %1006 = vmatpush1.msra.mxu0 %v401
        %1007 = vmatprep.subr.mxu0 %v404
        %1008 = vmatpush1.msra.mxu0 %v403
        %1009 = vmatprep.subr.mxu0 %v406
        %1010 = vmatpush1.msra.mxu0 %v405
        %1011 = vmatprep.subr.mxu0 %v408
        %1012 = vmatpush1.msra.mxu0 %v407
        %1013 = vmatprep.subr.mxu0 %v410
        %1014 = vmatpush1.msra.mxu0 %v409
        %1015 = vmatprep.subr.mxu0 %v412
        %1016 = vmatpush1.msra.mxu0 %v411
        %1017 = vmatprep.subr.mxu0 %v414
        %1018 = vmatpush1.msra.mxu0 %v413
        %1019 = vmatprep.subr.mxu0 %v416
        %1020 = vmatpush1.msra.mxu0 %v415
        %1021 = vmatprep.subr.mxu0 %v418
        %1022 = vmatpush1.msra.mxu0 %v417
        %1023 = vmatprep.subr.mxu0 %v420
        %1024 = vmatpush1.msra.mxu0 %v419
        %1025 = vmatprep.subr.mxu0 %v422
        %1026 = vmatpush1.msra.mxu0 %v421
        %1027 = vmatprep.subr.mxu0 %v424
        %1028 = vmatpush1.msra.mxu0 %v423
        %1029 = vmatprep.mubr.f32.mxu0 %v962
        %1030 = vmatmul.mubr.f32.gmra.mrb[0].mxu0 %v961
        %v1031 = vpop.f32.mrb[0].mxu0
        %v1032 = vadd.f32 1e-05, %v1031
        %v1033 = vpop.f32.mrb[0].mxu0
        %v1034 = vadd.f32 1e-05, %v1033
        %1035 = vmatprep.mubr.f32.mxu0 %v964
        %1036 = vmatmul.mubr.f32.gmra.mrb[0].mxu0 %v963
        %v1037 = vpop.f32.mrb[0].mxu0
        %v1038 = vadd.f32 1e-05, %v1037
        %v1039 = vpop.f32.mrb[0].mxu0
        %v1040 = vadd.f32 1e-05, %v1039
        %1041 = vdwg.mxu0
        %v1042 = vrsqrt.pop %v1032
        %v1043 = vrsqrt.pop %v1034
        %v1044 = vrsqrt.pop %v1038
        %v1045 = vrsqrt.pop %v1040
        %v1046 = vmul.f32 %v957, %v1042
        %v1047 = vmul.f32 %v958, %v1043
        %v1048 = vmul.f32 %v959, %v1044
        %v1049 = vmul.f32 %v960, %v1045
        %v1050 = vlaneseq
        %v1051 = vshrl.u32 %v1050, 7
        %v1052 = vsub.s32 1, %v1051
        %v1053 = vrot.slane %v360, %v1052
        %v1054 = vlaneseq
        %v1055 = vshrl.u32 %v1054, 7
        %v1056 = vsub.s32 5, %v1055
        %v1057 = vrot.slane %v360, %v1056
        %v1060 = vlaneseq
        %v1061 = vshrl.u32 %v1060, 7
        %v1062 = vsub.s32 1, %v1061
        %v1063 = vrot.slane %v1053, %v1062
        %v1064 = vlaneseq
        %v1065 = vshrl.u32 %v1064, 7
        %v1066 = vsub.s32 1, %v1065
        %v1067 = vrot.slane %v1057, %v1066
        %v1068 = vmul.f32 %v1046, %v1063
        %v1069 = vmul.f32 %v1047, %v1067
        %v1070 = vmul.f32 %v1048, %v1063
        %v1071 = vmul.f32 %v1049, %v1067
        %v1072 = vlaneseq
        %v1073 = vshrl.u32 %v1072, 7
        %v1074 = vsub.s32 2, %v1073
        %v1075 = vrot.slane %v360, %v1074
        %v1076 = vlaneseq
        %v1077 = vshrl.u32 %v1076, 7
        %v1078 = vsub.s32 6, %v1077
        %v1079 = vrot.slane %v360, %v1078
        %v1082 = vlaneseq
        %v1083 = vshrl.u32 %v1082, 7
        %v1084 = vsub.s32 2, %v1083
        %v1085 = vrot.slane %v1075, %v1084
        %v1086 = vlaneseq
        %v1087 = vshrl.u32 %v1086, 7
        %v1088 = vsub.s32 2, %v1087
        %v1089 = vrot.slane %v1079, %v1088
        %v1090 = vadd.f32 %v1068, %v1085
        %v1091 = vadd.f32 %v1069, %v1089
        %v1092 = vadd.f32 %v1070, %v1085
        %v1093 = vadd.f32 %v1071, %v1089
        %1094 = vst [vmem:[%s354] sm:$0xff] %v1090
        %1095 = vst [vmem:[%s354 + $0x8] sm:$0xff] %v1091
        %1096 = vst [vmem:[%s354 + $0x10] sm:$0xff] %v1092
        %1097 = vst [vmem:[%s354 + $0x18] sm:$0xff] %v1093
        %s1098 = sand.u32 %s186, 1
        %s1099 = scalar_lea.sflag [#allocation4], %s1098
        %s1100 = sand.u32 %s186, 1
        %s1101 = smul.addr %s1100, 32
        %s1102 = scalar_lea.vmem [#allocation11], %s1101
        // Predicated region
        $region69: #{tpu_custom_call.1} parent=47 // pred_check
          %p1103 = pneg %p196
        $region70: #{tpu_custom_call.1} parent=47 // pred_check_branch
          %1105 = sbr.rel (%p1103) target = $region72
        $region71: #{tpu_custom_call.1} parent=47 // pred_region
          %s1106 = smul.u32 2, %s26
          %s1108 = ssub.s32 512, 512
          %1109 = vsyncadd %s1099, %s1108
          %s1110 = smul.addr %s1106, 2
          %s1111 = smul.addr %s1110, 128
          %s1112 = scalar_lea.hbm %s7, %s1111
          %s1113 = sshll.u32 %s1102, 4
          %s1114 = int_to_ptr.vmem [resolvable:$true] %s1113
          %1119 = dma.vmem_to_hbm [thread:$0]  %s1114, 512, %s1112, %s1099, 256, 256, 16
        $region72: #{tpu_custom_call.1} parent=47 // pred_fallthru
          _
      $region48: #{tpu_custom_call.1} parent=5 // pred_fallthru
        _
      %p1120 = scmp.le.s32.totalorder 2, %s21
      // Predicated region
      $region73: #{tpu_custom_call.1} parent=5 // pred_check
        %p1121 = pneg %p1120
      $region74: #{tpu_custom_call.1} parent=5 // pred_check_branch
        %1123 = sbr.rel (%p1121) target = $region76
      $region75: #{tpu_custom_call.1} parent=5 // pred_region
        %s1124 = ssub.s32 %s21, 2
        // Predicated region
        $region77: #{tpu_custom_call.1} parent=75 // pred_check
          %p1125 = pneg %p202
        $region78: #{tpu_custom_call.1} parent=75 // pred_check_branch
          %1127 = sbr.rel (%p1125) target = $region80
        $region79: #{tpu_custom_call.1} parent=75 // pred_region
          %s1128 = sand.u32 %s187, 1
          %s1129 = scalar_lea.sflag [#allocation4], %s1128
          %s1130 = sand.u32 %s187, 1
          %s1131 = smul.addr %s1130, 32
          %s1132 = scalar_lea.vmem [#allocation11], %s1131
          %1133 = dma.done %s1129, 512
        $region80: #{tpu_custom_call.1} parent=75 // pred_fallthru
          _
      $region76: #{tpu_custom_call.1} parent=5 // pred_fallthru
        _
    $region6: #{tpu_custom_call.1} parent=1 // loop_footer
      %s25 = sadd.s32 1, %s21
    $region7: #{tpu_custom_call.1} parent=1 // loop_footer_branch
      %20 = sbr.rel target = $region3
    $region8: #{tpu_custom_call.1} parent=1 // loop_exit
      _
    %1134 = vsyncpa [#allocation3], 1
    %s1135 = scalar_lea.sflag [#allocation3], 1
    %1136 = vsyncpa %s1135, 1
    %1137 = vsyncpa [#allocation6], 1
    %1138 = vsyncpa [#allocation9], 1
    %1139 = vsyncpa [#allocation4], 1
    %s1140 = scalar_lea.sflag [#allocation4], 1
    %1141 = vsyncpa %s1140, 1

</llo_original>
